<compile_context>
chip_gen: v7x
topology: tpu7x:2x2x1
jax: 0.10.0
libtpu: 0.0.40
codegen_flags: <defaults>
</compile_context>

<pallas_src>
import functools

import numpy as np
import jax
import jax.numpy as jnp
from jax.experimental import pallas as pl
from jax.experimental.pallas import tpu as pltpu


# ----------------------------------------------------------------------------
# Pallas kernel
# ----------------------------------------------------------------------------
def _iwt_kernel(x_ref, p_ref, o_ref, *, W, G):
    # x_ref: (1, 4, tr, G*W)  -- all four sub-bands for the same (c, h-group) rows
    # p_ref: (4*W, 4*W)       -- constant 0/1 column-interleave (scatter) matrix
    # o_ref: (1, tr, 4*G*W)   -- lane-dense output rows
    x1 = x_ref[0, 0] * 0.5
    x2 = x_ref[0, 1] * 0.5
    x3 = x_ref[0, 2] * 0.5
    x4 = x_ref[0, 3] * 0.5

    ee = x1 - x2 - x3 + x4      # even row, even col
    oe = x1 - x2 + x3 - x4      # odd  row, even col
    eo = x1 + x2 - x3 - x4      # even row, odd  col
    oo = x1 + x2 + x3 + x4      # odd  row, odd  col

    p = p_ref[...]
    chunks = []
    for g in range(G):          # static unroll; G is small
        lo, hi = g * W, (g + 1) * W
        cg = jnp.concatenate(
            [ee[:, lo:hi], eo[:, lo:hi], oe[:, lo:hi], oo[:, lo:hi]], axis=-1)
        # P is a 0/1 permutation: HIGHEST keeps the pass-through bit-exact, and
        # with K = 4*W the kernel remains HBM-bound on v5e/v6e/v7x.
        chunks.append(jnp.dot(cg, p, preferred_element_type=jnp.float32,
                              precision=jax.lax.Precision.HIGHEST))
    o_ref[0] = jnp.concatenate(chunks, axis=-1).astype(o_ref.dtype)


# ----------------------------------------------------------------------------
# Static helpers (trace-time Python)
# ----------------------------------------------------------------------------
def _make_scatter(W):
    """(4W, 4W) 0/1 matrix mapping [ee|eo|oe|oo] -> [even-row 2W | odd-row 2W]."""
    P = np.zeros((4 * W, 4 * W), np.float32)
    for w in range(W):
        P[0 * W + w, 2 * w + 0] = 1.0              # ee -> even row, col 2w
        P[1 * W + w, 2 * w + 1] = 1.0              # eo -> even row, col 2w+1
        P[2 * W + w, 2 * W + 2 * w + 0] = 1.0      # oe -> odd  row, col 2w
        P[3 * W + w, 2 * W + 2 * w + 1] = 1.0      # oo -> odd  row, col 2w+1
    return jnp.asarray(P)


def _pick_group(H, W):
    """Group G H-rows per kernel row so the output row (4*G*W) is 128-multiple."""
    if (4 * W) % 128 == 0:
        return 1
    for g in range(1, H + 1):
        if H % g == 0 and (4 * g * W) % 128 == 0 and 4 * g * W <= 1024:
            return g
    best = 1
    for g in range(2, H + 1):
        if H % g == 0 and 4 * g * W <= 512:
            best = g
    return best


def _pick_row_tile(R, lane_in):
    """Largest row tile that keeps double-buffered blocks well under VMEM
    (v7x has only 64 MiB physical / ~32 MiB scoped)."""
    cap = max(8, min(2048, (1 << 16) // max(lane_in, 1)))
    if R <= cap:
        return R
    best = None
    for t in range(8, cap + 1, 8):      # keep the (8, 128) block constraint
        if R % t == 0:
            best = t
    if best is None:
        # TODO(synk): pad R up to a multiple of 8 instead of one big block.
        return R
    return best


# ----------------------------------------------------------------------------
# Wrapper
# ----------------------------------------------------------------------------
def iwt(x):
    B, C, H, W = x.shape
    assert C % 4 == 0, "IWT needs channels divisible by 4"
    Co = C // 4

    G = _pick_group(H, W)
    R = (Co * H) // G
    lane_in = G * W
    lane_out = 4 * G * W
    tr = _pick_row_tile(R, lane_in)

    xr = x.reshape(B, 4, R, lane_in)              # free reshape (row-major)
    P = _make_scatter(W)

    kern = functools.partial(_iwt_kernel, W=W, G=G)
    y = pl.pallas_call(
        kern,
        out_shape=jax.ShapeDtypeStruct((B, R, lane_out), x.dtype),
        grid_spec=pltpu.PrefetchScalarGridSpec(
            num_scalar_prefetch=0,
            grid=(B, R // tr),
            in_specs=[
                pl.BlockSpec((1, 4, tr, lane_in), lambda b, i: (b, 0, i, 0)),
                pl.BlockSpec((4 * W, 4 * W), lambda b, i: (0, 0)),
            ],
            out_specs=pl.BlockSpec((1, tr, lane_out), lambda b, i: (b, i, 0)),
        ),
        compiler_params=pltpu.CompilerParams(
            dimension_semantics=("parallel", "parallel")),
    )(xr, P)

    # Byte-identical relabeling of the kernel output -> NCHW (B, Co, 2H, 2W).
    return y.reshape(B, Co, 2 * H, 2 * W)         # free reshape


# ----------------------------------------------------------------------------
# Pure-JAX reference (mirror of the PyTorch iwt_init)
# ----------------------------------------------------------------------------
def iwt_reference(x):
    B, C, H, W = x.shape
    Co = C // 4
    x1 = x[:, 0 * Co:1 * Co] / 2
    x2 = x[:, 1 * Co:2 * Co] / 2
    x3 = x[:, 2 * Co:3 * Co] / 2
    x4 = x[:, 3 * Co:4 * Co] / 2
    h = jnp.zeros((B, Co, 2 * H, 2 * W), x.dtype)
    h = h.at[:, :, 0::2, 0::2].set(x1 - x2 - x3 + x4)
    h = h.at[:, :, 1::2, 0::2].set(x1 - x2 + x3 - x4)
    h = h.at[:, :, 0::2, 1::2].set(x1 + x2 - x3 - x4)
    h = h.at[:, :, 1::2, 1::2].set(x1 + x2 + x3 + x4)
    return h


# ----------------------------------------------------------------------------
if __name__ == "__main__":
    B, C, H, W = 2, 4, 16, 16
    x = jax.random.normal(jax.random.PRNGKey(0), (B, C, H, W), jnp.float32)

    out = jax.block_until_ready(jax.jit(iwt)(x))
    assert out.shape == (B, C // 4, 2 * H, 2 * W)
    assert out.dtype == jnp.float32

    ref = jax.block_until_ready(iwt_reference(x))
    assert jnp.allclose(out, ref, atol=1e-5, rtol=1e-5), \
        float(jnp.max(jnp.abs(out - ref)))

    print("KERNEL_OK")
</pallas_src>

<mosaic_0001>
module attributes {stable_mosaic.version = 11 : i64} {
  func.func @_iwt_kernel(%arg0: i32, %arg1: i32, %arg2: memref<1x4x8x32xf32, #tpu.memory_space<vmem>>, %arg3: memref<64x64xf32, #tpu.memory_space<vmem>>, %arg4: memref<1x8x128xf32, #tpu.memory_space<vmem>>) attributes {dimension_semantics = [#tpu.dimension_semantics<parallel>, #tpu.dimension_semantics<parallel>], iteration_bounds = array<i64: 2, 1>, scalar_prefetch = 0 : i64, scratch_operands = 0 : i64, tpu.core_type = #tpu.core_type<tc>, window_params = [{transform_indices = @transform_0, window_bounds = array<i64: 1, 4, 8, 32>}, {pipeline_mode = #tpu.pipeline_mode<synchronous>, transform_indices = @transform_1, window_bounds = array<i64: 64, 64>}, {transform_indices = @transform_2, window_bounds = array<i64: 1, 8, 128>}]} {
    %c0 = arith.constant 0 : index
    %c0_0 = arith.constant 0 : index
    %c0_1 = arith.constant 0 : index
    %c0_2 = arith.constant 0 : index
    %0 = vector.load %arg2[%c0, %c0_0, %c0_1, %c0_2] : memref<1x4x8x32xf32, #tpu.memory_space<vmem>>, vector<1x1x8x32xf32>
    %1 = vector.shape_cast %0 : vector<1x1x8x32xf32> to vector<8x32xf32>
    %cst = arith.constant 5.000000e-01 : f32
    %2 = vector.broadcast %cst : f32 to vector<8x32xf32>
    %3 = arith.mulf %1, %2 : vector<8x32xf32>
    %c0_3 = arith.constant 0 : index
    %c1 = arith.constant 1 : index
    %c0_4 = arith.constant 0 : index
    %c0_5 = arith.constant 0 : index
    %4 = vector.load %arg2[%c0_3, %c1, %c0_4, %c0_5] : memref<1x4x8x32xf32, #tpu.memory_space<vmem>>, vector<1x1x8x32xf32>
    %5 = vector.shape_cast %4 : vector<1x1x8x32xf32> to vector<8x32xf32>
    %cst_6 = arith.constant 5.000000e-01 : f32
    %6 = vector.broadcast %cst_6 : f32 to vector<8x32xf32>
    %7 = arith.mulf %5, %6 : vector<8x32xf32>
    %c0_7 = arith.constant 0 : index
    %c2 = arith.constant 2 : index
    %c0_8 = arith.constant 0 : index
    %c0_9 = arith.constant 0 : index
    %8 = vector.load %arg2[%c0_7, %c2, %c0_8, %c0_9] : memref<1x4x8x32xf32, #tpu.memory_space<vmem>>, vector<1x1x8x32xf32>
    %9 = vector.shape_cast %8 : vector<1x1x8x32xf32> to vector<8x32xf32>
    %cst_10 = arith.constant 5.000000e-01 : f32
    %10 = vector.broadcast %cst_10 : f32 to vector<8x32xf32>
    %11 = arith.mulf %9, %10 : vector<8x32xf32>
    %c0_11 = arith.constant 0 : index
    %c3 = arith.constant 3 : index
    %c0_12 = arith.constant 0 : index
    %c0_13 = arith.constant 0 : index
    %12 = vector.load %arg2[%c0_11, %c3, %c0_12, %c0_13] : memref<1x4x8x32xf32, #tpu.memory_space<vmem>>, vector<1x1x8x32xf32>
    %13 = vector.shape_cast %12 : vector<1x1x8x32xf32> to vector<8x32xf32>
    %cst_14 = arith.constant 5.000000e-01 : f32
    %14 = vector.broadcast %cst_14 : f32 to vector<8x32xf32>
    %15 = arith.mulf %13, %14 : vector<8x32xf32>
    %16 = arith.subf %3, %7 : vector<8x32xf32>
    %17 = arith.subf %16, %11 : vector<8x32xf32>
    %18 = arith.addf %17, %15 : vector<8x32xf32>
    %19 = arith.subf %3, %7 : vector<8x32xf32>
    %20 = arith.addf %19, %11 : vector<8x32xf32>
    %21 = arith.subf %20, %15 : vector<8x32xf32>
    %22 = arith.addf %3, %7 : vector<8x32xf32>
    %23 = arith.subf %22, %11 : vector<8x32xf32>
    %24 = arith.subf %23, %15 : vector<8x32xf32>
    %25 = arith.addf %3, %7 : vector<8x32xf32>
    %26 = arith.addf %25, %11 : vector<8x32xf32>
    %27 = arith.addf %26, %15 : vector<8x32xf32>
    %c0_15 = arith.constant 0 : index
    %c0_16 = arith.constant 0 : index
    %28 = vector.load %arg3[%c0_15, %c0_16] : memref<64x64xf32, #tpu.memory_space<vmem>>, vector<64x64xf32>
    %29 = vector.extract_strided_slice %18 {offsets = [0, 0], sizes = [8, 16], strides = [1, 1]} : vector<8x32xf32> to vector<8x16xf32>
    %30 = vector.extract_strided_slice %24 {offsets = [0, 0], sizes = [8, 16], strides = [1, 1]} : vector<8x32xf32> to vector<8x16xf32>
    %31 = vector.extract_strided_slice %21 {offsets = [0, 0], sizes = [8, 16], strides = [1, 1]} : vector<8x32xf32> to vector<8x16xf32>
    %32 = vector.extract_strided_slice %27 {offsets = [0, 0], sizes = [8, 16], strides = [1, 1]} : vector<8x32xf32> to vector<8x16xf32>
    %33 = tpu.concatenate %29, %30, %31, %32 in 1 : vector<8x16xf32>, vector<8x16xf32>, vector<8x16xf32>, vector<8x16xf32> -> vector<8x64xf32>
    %cst_17 = arith.constant dense<0.000000e+00> : vector<8x64xf32>
    %34 = tpu.matmul %33, %28, %cst_17 {dimension_numbers = #tpu.dot_dimension_numbers<[1], [0], [0], [1], [0, 0, 1, 1], [], []>, precision = #tpu.contract_precision<fp32>} : vector<8x64xf32>, vector<64x64xf32>, vector<8x64xf32> -> vector<8x64xf32>
    %35 = vector.extract_strided_slice %18 {offsets = [0, 16], sizes = [8, 16], strides = [1, 1]} : vector<8x32xf32> to vector<8x16xf32>
    %36 = vector.extract_strided_slice %24 {offsets = [0, 16], sizes = [8, 16], strides = [1, 1]} : vector<8x32xf32> to vector<8x16xf32>
    %37 = vector.extract_strided_slice %21 {offsets = [0, 16], sizes = [8, 16], strides = [1, 1]} : vector<8x32xf32> to vector<8x16xf32>
    %38 = vector.extract_strided_slice %27 {offsets = [0, 16], sizes = [8, 16], strides = [1, 1]} : vector<8x32xf32> to vector<8x16xf32>
    %39 = tpu.concatenate %35, %36, %37, %38 in 1 : vector<8x16xf32>, vector<8x16xf32>, vector<8x16xf32>, vector<8x16xf32> -> vector<8x64xf32>
    %cst_18 = arith.constant dense<0.000000e+00> : vector<8x64xf32>
    %40 = tpu.matmul %39, %28, %cst_18 {dimension_numbers = #tpu.dot_dimension_numbers<[1], [0], [0], [1], [0, 0, 1, 1], [], []>, precision = #tpu.contract_precision<fp32>} : vector<8x64xf32>, vector<64x64xf32>, vector<8x64xf32> -> vector<8x64xf32>
    %41 = tpu.concatenate %34, %40 in 1 : vector<8x64xf32>, vector<8x64xf32> -> vector<8x128xf32>
    %c0_19 = arith.constant 0 : index
    %c0_20 = arith.constant 0 : index
    %c0_21 = arith.constant 0 : index
    %42 = vector.load %arg4[%c0_19, %c0_20, %c0_21] : memref<1x8x128xf32, #tpu.memory_space<vmem>>, vector<1x8x128xf32>
    %43 = vector.shape_cast %42 : vector<1x8x128xf32> to vector<8x128xf32>
    %44 = vector.shape_cast %41 : vector<8x128xf32> to vector<1x8x128xf32>
    tpu.vector_store %arg4[%c0_19, %c0_20, %c0_21], %44 {strides = array<i32>} : memref<1x8x128xf32, #tpu.memory_space<vmem>>, vector<1x8x128xf32>,
    return
  }
  func.func @transform_0(%arg0: i32, %arg1: i32) -> (i32, i32, i32, i32) {
    %c0_i32 = arith.constant 0 : i32
    %c0_i32_0 = arith.constant 0 : i32
    %c0_i32_1 = arith.constant 0 : i32
    return %arg0, %c0_i32, %arg1, %c0_i32_0 : i32, i32, i32, i32
  }
  func.func @transform_1(%arg0: i32, %arg1: i32) -> (i32, i32) {
    %c0_i32 = arith.constant 0 : i32
    %c0_i32_0 = arith.constant 0 : i32
    %c0_i32_1 = arith.constant 0 : i32
    return %c0_i32, %c0_i32_0 : i32, i32
  }
  func.func @transform_2(%arg0: i32, %arg1: i32) -> (i32, i32, i32) {
    %c0_i32 = arith.constant 0 : i32
    %c0_i32_0 = arith.constant 0 : i32
    return %arg0, %arg1, %c0_i32 : i32, i32, i32
  }
}

</mosaic_0001>

<llo_original>
// kernel: iwt.1
$region0: #{iwt.1}
  #allocation0 [shape = 'u32[]', space=smem, size = 0x4, offset = 0x4, fixed_abs, tag = 'smem constant byte address 0x4 - core index']
  #allocation1 [shape = 'u32[144,128]{1,0:T(1,128)}', space=vmem, size = 0x12000, scoped, tag = 'internal scratch']
  %s0 = inlined_call_operand.vmem [shape: f32[2,4,8,32], index: 0, kind: input, shape index: {}]
  %s1 = inlined_call_operand.vmem [shape: f32[64,64], index: 1, kind: input, shape index: {}]
  %s2 = inlined_call_operand.vmem [shape: f32[2,8,128], index: 2, kind: output, shape index: {}]
  %s3 = sld [smem:[#allocation0]]
  $region41: #{iwt.1} parent=0
    _
  %s5 = ssub.s32 1, %s3
  %s6 = scalar_select 0, %s5, %s3
  loop: start=0, step=1, limit=4
  $region2: #{iwt.1} parent=0 // loop_pre_header
    _
  $region3: #{iwt.1} parent=0 // loop_header
    %s8 = sphi 0, %s12
    %p9 = scmp.ge.s32.totalorder %s8, 4
    %s15 = sphi 0, %s27
    %s16 = sphi 0, %s23
    %s17 = sphi 0, %s15
    %s18 = sphi 0, %s16
    %s19 = sphi 0, %s17
    %s20 = sphi 0, %s18
    %s32 = sphi 0, %s34
    %s35 = sphi 0, %s32
    %s36 = sphi 0, %s35
    %s52 = sphi 0, %s36
    %s56 = sphi 0, %s56
    %s58 = sphi 0, %s56
    %s59 = sphi 0, %s58
    %s73 = sphi 0, %s59
    %s81 = sphi 0, %s83
    %s84 = sphi 0, %s81
    %s85 = sphi 0, %s84
    %s101 = sphi 0, %s85
  $region4: #{iwt.1} parent=0 // loop_header_branch
    %11 = sbr.rel (%p9) target = $region8
  $region5: #{iwt.1} parent=0 // loop_body
    %s13 = ssub.s32 %s8, 1
    %s14 = ssub.s32 %s8, 2
    %s21 = sadd.s32 1, %s16
    %p22 = scmp.ge.s32.totalorder %s21, 1
    %s23 = scalar_select %p22, 0, %s21
    %s24 = sadd.s32 1, %s15
    %s25 = scalar_select %p22, %s24, %s15
    %p26 = scmp.ge.s32.totalorder %s25, 2
    %s27 = scalar_select %p26, 0, %s25
    %s28 = ssub.s32 %s15, %s27
    %s29 = ssub.s32 %s16, %s23
    %s30 = sor.u32 %s28, %s29
    %p31 = scmp.eq.s32.totalorder %s30, 0
    %s33 = sadd.s32 %s32, 1
    %s34 = scalar_select %p31, %s32, %s33
    %p37 = pneg %p31
    %p38 = scmp.eq.s32.totalorder %s8, 1
    %p39 = por %p37, %p38
    %p40 = scmp.ne.s32.totalorder %s32, %s35
    %p41 = scmp.eq.s32.totalorder %s8, 0
    %p42 = por %p40, %p41
    %p43 = scmp.ne.s32.totalorder %s32, %s35
    %p44 = scmp.eq.s32.totalorder %s13, 1
    %p45 = por %p43, %p44
    %p46 = scmp.ne.s32.totalorder %s35, %s36
    %p47 = scmp.eq.s32.totalorder %s13, 0
    %p48 = por %p46, %p47
    %p49 = scmp.ne.s32.totalorder %s35, %s36
    %p50 = scmp.eq.s32.totalorder %s14, 1
    %p51 = por %p49, %p50
    %p53 = scmp.ne.s32.totalorder %s36, %s52
    %p54 = scmp.eq.s32.totalorder %s14, 0
    %p55 = por %p53, %p54
    %s57 = sadd.s32 %s56, 1
    %p60 = scmp.eq.s32.totalorder %s8, 1
    %p61 = scmp.ne.s32.totalorder %s56, %s58
    %p62 = scmp.eq.s32.totalorder %s8, 0
    %p63 = por %p61, %p62
    %p64 = scmp.ne.s32.totalorder %s56, %s58
    %p65 = scmp.eq.s32.totalorder %s13, 1
    %p66 = por %p64, %p65
    %p67 = scmp.ne.s32.totalorder %s58, %s59
    %p68 = scmp.eq.s32.totalorder %s13, 0
    %p69 = por %p67, %p68
    %p70 = scmp.ne.s32.totalorder %s58, %s59
    %p71 = scmp.eq.s32.totalorder %s14, 1
    %p72 = por %p70, %p71
    %p74 = scmp.ne.s32.totalorder %s59, %s73
    %p75 = scmp.eq.s32.totalorder %s14, 0
    %p76 = por %p74, %p75
    %s77 = ssub.s32 %s15, %s27
    %s78 = ssub.s32 %s16, %s23
    %s79 = sor.u32 %s77, %s78
    %p80 = scmp.eq.s32.totalorder %s79, 0
    %s82 = sadd.s32 %s81, 1
    %s83 = scalar_select %p80, %s81, %s82
    %p86 = pneg %p80
    %p87 = scmp.eq.s32.totalorder %s8, 1
    %p88 = por %p86, %p87
    %p89 = scmp.ne.s32.totalorder %s81, %s84
    %p90 = scmp.eq.s32.totalorder %s8, 0
    %p91 = por %p89, %p90
    %p92 = scmp.ne.s32.totalorder %s81, %s84
    %p93 = scmp.eq.s32.totalorder %s13, 1
    %p94 = por %p92, %p93
    %p95 = scmp.ne.s32.totalorder %s84, %s85
    %p96 = scmp.eq.s32.totalorder %s13, 0
    %p97 = por %p95, %p96
    %p98 = scmp.ne.s32.totalorder %s84, %s85
    %p99 = scmp.eq.s32.totalorder %s14, 1
    %p100 = por %p98, %p99
    %p102 = scmp.ne.s32.totalorder %s85, %s101
    %p103 = scmp.eq.s32.totalorder %s14, 0
    %p104 = por %p102, %p103
    %p105 = scmp.le.s32.totalorder 1, %s8
    %p106 = scmp.lt.s32.totalorder %s8, 3
    %p107 = pnand %p105, %p106
    %p108 = pneg %p107
    // Predicated region
    $region9: #{iwt.1} parent=5 // pred_check
      _
    $region10: #{iwt.1} parent=5 // pred_check_branch
      %110 = sbr.rel (%p107) target = $region12
    $region11: #{iwt.1} parent=5 // pred_region
      %s111 = ssub.s32 %s8, 1
      // Predicated region
      $region13: #{iwt.1} parent=11 // pred_check
        %p112 = pneg %p69
      $region14: #{iwt.1} parent=11 // pred_check_branch
        %114 = sbr.rel (%p112) target = $region16
      $region15: #{iwt.1} parent=11 // pred_region
        _
      $region16: #{iwt.1} parent=11 // pred_fallthru
        _
    $region12: #{iwt.1} parent=5 // pred_fallthru
      _
    %p115 = scmp.lt.s32.totalorder %s8, 2
    // Predicated region
    $region17: #{iwt.1} parent=5 // pred_check
      %p116 = pneg %p115
    $region18: #{iwt.1} parent=5 // pred_check_branch
      %118 = sbr.rel (%p116) target = $region20
    $region19: #{iwt.1} parent=5 // pred_region
      // Predicated region
      $region21: #{iwt.1} parent=19 // pred_check
        %p119 = pneg %p42
      $region22: #{iwt.1} parent=19 // pred_check_branch
        %121 = sbr.rel (%p119) target = $region24
      $region23: #{iwt.1} parent=19 // pred_region
        %p122 = scmp.lt.s32.totalorder %s15, 1
        %s123 = scalar_select %p122, %s15, 1
        %p124 = scmp.lt.s32.totalorder %s16, 0
        %s125 = scalar_select %p124, %s16, 0
        %s126 = smul.addr %s123, 4
        %s127 = sadd.s32 %s125, %s126
        %s128 = smul.addr %s127, 8
        %s129 = scalar_lea.vmem %s0, %s128
      $region24: #{iwt.1} parent=19 // pred_fallthru
        _
    $region20: #{iwt.1} parent=5 // pred_fallthru
      _
    %p130 = scmp.le.s32.totalorder 1, %s8
    %p131 = scmp.lt.s32.totalorder %s8, 3
    %p132 = pnand %p130, %p131
    %p133 = pneg %p132
    // Predicated region
    $region25: #{iwt.1} parent=5 // pred_check
      _
    $region26: #{iwt.1} parent=5 // pred_check_branch
      %135 = sbr.rel (%p132) target = $region28
    $region27: #{iwt.1} parent=5 // pred_region
      %s136 = ssub.s32 %s8, 1
      %p137 = scmp.lt.s32.totalorder %s17, 1
      %s138 = scalar_select %p137, %s17, 1
      %p139 = scmp.lt.s32.totalorder %s18, 0
      %s140 = scalar_select %p139, %s18, 0
      %s141 = smul.addr %s138, 4
      %s142 = sadd.s32 %s140, %s141
      %s143 = smul.addr %s142, 8
      %s144 = scalar_lea.vmem %s0, %s143
      %p145 = pneg %p48
      %p146 = pneg %p45
      %p147 = pneg %p69
      %p148 = pneg %p66
      %p149 = pneg %p97
      %p150 = pneg %p94
      %p151 = scmp.lt.s32.totalorder %s17, 1
      %s152 = scalar_select %p151, %s17, 1
      %p153 = scmp.lt.s32.totalorder %s18, 0
      %s154 = scalar_select %p153, %s18, 0
      %s155 = sadd.s32 %s154, %s152
      %s156 = smul.addr %s155, 8
      %s157 = scalar_lea.vmem %s2, %s156
      %p158 = scmp.lt.s32.totalorder %s17, 1
      %s159 = scalar_select %p158, %s17, 1
      %p160 = scmp.lt.s32.totalorder %s18, 0
      %s161 = scalar_select %p160, %s18, 0
      %s162 = smul.addr %s159, 4
      %s163 = sadd.s32 %s161, %s162
      %s164 = smul.addr %s163, 8
      %s165 = scalar_lea.vmem %s0, %s164
      %p166 = scmp.lt.s32.totalorder %s17, 1
      %s167 = scalar_select %p166, %s17, 1
      %p168 = scmp.lt.s32.totalorder %s18, 0
      %s169 = scalar_select %p168, %s18, 0
      %s170 = sadd.s32 %s169, %s167
      %s171 = smul.addr %s170, 8
      %s172 = scalar_lea.vmem %s2, %s171
      %v173 = vld [vmem:[%s165] sm:$0xff]
      %v174 = vmul.f32 %v173, 0.5
      %s175 = scalar_lea.vmem %s165, 8
      %v176 = vld [vmem:[%s175] sm:$0xff]
      %v177 = vmul.f32 %v176, 0.5
      %s178 = scalar_lea.vmem %s165, 16
      %v179 = vld [vmem:[%s178] sm:$0xff]
      %v180 = vmul.f32 %v179, 0.5
      %s181 = scalar_lea.vmem %s165, 24
      %v182 = vld [vmem:[%s181] sm:$0xff]
      %v183 = vmul.f32 %v182, 0.5
      %v184 = vsub.f32 %v174, %v177
      %v185 = vsub.f32 %v184, %v180
      %v186 = vadd.f32 %v185, %v183
      %v187 = vadd.f32 %v184, %v180
      %v188 = vsub.f32 %v187, %v183
      %v189 = vadd.f32 %v174, %v177
      %v190 = vsub.f32 %v189, %v180
      %v191 = vsub.f32 %v190, %v183
      %v192 = vadd.f32 %v189, %v180
      %v193 = vadd.f32 %v192, %v183
      %v194 = vld [vmem:[%s1] sm:$0xff]
      %v195 = vld [vmem:[%s1 + $0x8] sm:$0xff]
      %v196 = vld [vmem:[%s1 + $0x10] sm:$0xff]
      %v197 = vld [vmem:[%s1 + $0x18] sm:$0xff]
      %v198 = vld [vmem:[%s1 + $0x20] sm:$0xff]
      %v199 = vld [vmem:[%s1 + $0x28] sm:$0xff]
      %v200 = vld [vmem:[%s1 + $0x30] sm:$0xff]
      %v201 = vld [vmem:[%s1 + $0x38] sm:$0xff]
      %203 = vrot.lane.b32.xlu0 %v191, 16
      %v204 = vpop.permute.xlu0 %203
      %207 = vrot.lane.b32.xlu0 %v188, 32
      %v208 = vpop.permute.xlu0 %207
      %211 = vrot.lane.b32.xlu0 %v193, 48
      %v212 = vpop.permute.xlu0 %211
      %vm214 = vcmask 130048
      %v215 = vsel %vm214, %v186, %v204
      %vm216 = vcmask 261120
      %v217 = vsel %vm216, %v215, %v208
      %vm218 = vcmask 392192
      %v219 = vsel %vm218, %v217, %v212
      %vm220 = vcmask 523264
      %v222 = vsel %vm220, %v219, 0
      %224 = vmatprep.subr.mxu0 0.0
      %v225 = vand.u32 %v194, 4294901760
      %226 = vmatpush1.msra.mxu0 %v225
      %227 = vmatprep.subr.mxu0 0.0
      %v228 = vand.u32 %v195, 4294901760
      %229 = vmatpush1.msra.mxu0 %v228
      %230 = vmatprep.subr.mxu0 0.0
      %v231 = vand.u32 %v196, 4294901760
      %232 = vmatpush1.msra.mxu0 %v231
      %233 = vmatprep.subr.mxu0 0.0
      %v234 = vand.u32 %v197, 4294901760
      %235 = vmatpush1.msra.mxu0 %v234
      %236 = vmatprep.subr.mxu0 0.0
      %v237 = vand.u32 %v198, 4294901760
      %238 = vmatpush1.msra.mxu0 %v237
      %239 = vmatprep.subr.mxu0 0.0
      %v240 = vand.u32 %v199, 4294901760
      %241 = vmatpush1.msra.mxu0 %v240
      %242 = vmatprep.subr.mxu0 0.0
      %v243 = vand.u32 %v200, 4294901760
      %244 = vmatpush1.msra.mxu0 %v243
      %245 = vmatprep.subr.mxu0 0.0
      %v246 = vand.u32 %v201, 4294901760
      %247 = vmatpush1.msra.mxu0 %v246
      %248 = vmatprep.subr.mxu0 0.0
      %249 = vmatpush1.msra.mxu0 0.0
      %250 = vmatprep.subr.mxu0 0.0
      %251 = vmatpush1.msra.mxu0 0.0
      %252 = vmatprep.subr.mxu0 0.0
      %253 = vmatpush1.msra.mxu0 0.0
      %254 = vmatprep.subr.mxu0 0.0
      %255 = vmatpush1.msra.mxu0 0.0
      %256 = vmatprep.subr.mxu0 0.0
      %257 = vmatpush1.msra.mxu0 0.0
      %258 = vmatprep.subr.mxu0 0.0
      %259 = vmatpush1.msra.mxu0 0.0
      %260 = vmatprep.subr.mxu0 0.0
      %261 = vmatpush1.msra.mxu0 0.0
      %262 = vmatprep.subr.mxu0 0.0
      %263 = vmatpush1.msra.mxu0 0.0
      %264 = vmatprep.subr.mxu0 0.0
      %265 = vmatpush1.msra.mxu0 0.0
      %266 = vmatprep.subr.mxu0 0.0
      %267 = vmatpush1.msra.mxu0 0.0
      %268 = vmatprep.subr.mxu0 0.0
      %269 = vmatpush1.msra.mxu0 0.0
      %270 = vmatprep.subr.mxu0 0.0
      %271 = vmatpush1.msra.mxu0 0.0
      %272 = vmatprep.subr.mxu0 0.0
      %273 = vmatpush1.msra.mxu0 0.0
      %274 = vmatprep.subr.mxu0 0.0
      %275 = vmatpush1.msra.mxu0 0.0
      %276 = vmatprep.subr.mxu0 0.0
      %277 = vmatpush1.msra.mxu0 0.0
      %278 = vmatprep.subr.mxu0 0.0
      %279 = vmatpush1.msra.mxu0 0.0
      %280 = vmatprep.subr.mxu0 0.0
      %281 = vmatpush1.msra.mxu0 0.0
      %282 = vmatprep.subr.mxu0 0.0
      %283 = vmatpush1.msra.mxu0 0.0
      %284 = vmatprep.subr.mxu0 0.0
      %285 = vmatpush1.msra.mxu0 0.0
      %286 = vmatprep.subr.mxu0 0.0
      %287 = vmatpush1.msra.mxu0 0.0
      %288 = vmatprep.subr.mxu0 0.0
      %289 = vmatpush1.msra.mxu0 0.0
      %290 = vmatprep.subr.mxu0 0.0
      %291 = vmatpush1.msra.mxu0 0.0
      %292 = vmatprep.subr.mxu0 0.0
      %293 = vmatpush1.msra.mxu0 0.0
      %294 = vmatprep.subr.mxu0 0.0
      %295 = vmatpush1.msra.mxu0 0.0
      %296 = vmatprep.mubr.f32.mxu0 0.0
      %v297 = vand.u32 %v222, 4294901760
      %v298 = vsub.f32 %v222, %v297
      %v299 = vand.u32 %v298, 4294901760
      %v300 = vsub.f32 %v298, %v299
      %v301 = vand.u32 %v300, 4294901760
      %302 = vmatmul.mubr.f32.gmra.mrb[0].mxu0 %v301
      %v303 = vpop.f32.mrb[0].mxu0
      %v304 = vadd.f32 0.0, %v303
      %v305 = vpop.f32.mrb[0].mxu0
      %306 = vdwg.mxu0
      %307 = vmatprep.subr.mxu0 0.0
      %v308 = vand.u32 %v194, 4294901760
      %v309 = vsub.f32 %v194, %v308
      %v310 = vand.u32 %v309, 4294901760
      %v311 = vsub.f32 %v309, %v310
      %v312 = vand.u32 %v311, 4294901760
      %313 = vmatpush1.msra.mxu0 %v312
      %314 = vmatprep.subr.mxu0 0.0
      %v315 = vand.u32 %v195, 4294901760
      %v316 = vsub.f32 %v195, %v315
      %v317 = vand.u32 %v316, 4294901760
      %v318 = vsub.f32 %v316, %v317
      %v319 = vand.u32 %v318, 4294901760
      %320 = vmatpush1.msra.mxu0 %v319
      %321 = vmatprep.subr.mxu0 0.0
      %v322 = vand.u32 %v196, 4294901760
      %v323 = vsub.f32 %v196, %v322
      %v324 = vand.u32 %v323, 4294901760
      %v325 = vsub.f32 %v323, %v324
      %v326 = vand.u32 %v325, 4294901760
      %327 = vmatpush1.msra.mxu0 %v326
      %328 = vmatprep.subr.mxu0 0.0
      %v329 = vand.u32 %v197, 4294901760
      %v330 = vsub.f32 %v197, %v329
      %v331 = vand.u32 %v330, 4294901760
      %v332 = vsub.f32 %v330, %v331
      %v333 = vand.u32 %v332, 4294901760
      %334 = vmatpush1.msra.mxu0 %v333
      %335 = vmatprep.subr.mxu0 0.0
      %v336 = vand.u32 %v198, 4294901760
      %v337 = vsub.f32 %v198, %v336
      %v338 = vand.u32 %v337, 4294901760
      %v339 = vsub.f32 %v337, %v338
      %v340 = vand.u32 %v339, 4294901760
      %341 = vmatpush1.msra.mxu0 %v340
      %342 = vmatprep.subr.mxu0 0.0
      %v343 = vand.u32 %v199, 4294901760
      %v344 = vsub.f32 %v199, %v343
      %v345 = vand.u32 %v344, 4294901760
      %v346 = vsub.f32 %v344, %v345
      %v347 = vand.u32 %v346, 4294901760
      %348 = vmatpush1.msra.mxu0 %v347
      %349 = vmatprep.subr.mxu0 0.0
      %v350 = vand.u32 %v200, 4294901760
      %v351 = vsub.f32 %v200, %v350
      %v352 = vand.u32 %v351, 4294901760
      %v353 = vsub.f32 %v351, %v352
      %v354 = vand.u32 %v353, 4294901760
      %355 = vmatpush1.msra.mxu0 %v354
      %356 = vmatprep.subr.mxu0 0.0
      %v357 = vand.u32 %v201, 4294901760
      %v358 = vsub.f32 %v201, %v357
      %v359 = vand.u32 %v358, 4294901760
      %v360 = vsub.f32 %v358, %v359
      %v361 = vand.u32 %v360, 4294901760
      %362 = vmatpush1.msra.mxu0 %v361
      %363 = vmatprep.subr.mxu0 0.0
      %364 = vmatpush1.msra.mxu0 0.0
      %365 = vmatprep.subr.mxu0 0.0
      %366 = vmatpush1.msra.mxu0 0.0
      %367 = vmatprep.subr.mxu0 0.0
      %368 = vmatpush1.msra.mxu0 0.0
      %369 = vmatprep.subr.mxu0 0.0
      %370 = vmatpush1.msra.mxu0 0.0
      %371 = vmatprep.subr.mxu0 0.0
      %372 = vmatpush1.msra.mxu0 0.0
      %373 = vmatprep.subr.mxu0 0.0
      %374 = vmatpush1.msra.mxu0 0.0
      %375 = vmatprep.subr.mxu0 0.0
      %376 = vmatpush1.msra.mxu0 0.0
      %377 = vmatprep.subr.mxu0 0.0
      %378 = vmatpush1.msra.mxu0 0.0
      %379 = vmatprep.subr.mxu0 0.0
      %380 = vmatpush1.msra.mxu0 0.0
      %381 = vmatprep.subr.mxu0 0.0
      %382 = vmatpush1.msra.mxu0 0.0
      %383 = vmatprep.subr.mxu0 0.0
      %384 = vmatpush1.msra.mxu0 0.0
      %385 = vmatprep.subr.mxu0 0.0
      %386 = vmatpush1.msra.mxu0 0.0
      %387 = vmatprep.subr.mxu0 0.0
      %388 = vmatpush1.msra.mxu0 0.0
      %389 = vmatprep.subr.mxu0 0.0
      %390 = vmatpush1.msra.mxu0 0.0
      %391 = vmatprep.subr.mxu0 0.0
      %392 = vmatpush1.msra.mxu0 0.0
      %393 = vmatprep.subr.mxu0 0.0
      %394 = vmatpush1.msra.mxu0 0.0
      %395 = vmatprep.subr.mxu0 0.0
      %396 = vmatpush1.msra.mxu0 0.0
      %397 = vmatprep.subr.mxu0 0.0
      %398 = vmatpush1.msra.mxu0 0.0
      %399 = vmatprep.subr.mxu0 0.0
      %400 = vmatpush1.msra.mxu0 0.0
      %401 = vmatprep.subr.mxu0 0.0
      %402 = vmatpush1.msra.mxu0 0.0
      %403 = vmatprep.subr.mxu0 0.0
      %404 = vmatpush1.msra.mxu0 0.0
      %405 = vmatprep.subr.mxu0 0.0
      %406 = vmatpush1.msra.mxu0 0.0
      %407 = vmatprep.subr.mxu0 0.0
      %408 = vmatpush1.msra.mxu0 0.0
      %409 = vmatprep.subr.mxu0 0.0
      %410 = vmatpush1.msra.mxu0 0.0
      %411 = vmatprep.mubr.f32.mxu0 0.0
      %v412 = vand.u32 %v222, 4294901760
      %413 = vmatmul.mubr.f32.gmra.mrb[0].mxu0 %v412
      %v414 = vpop.f32.mrb[0].mxu0
      %v415 = vadd.f32 %v304, %v414
      %v416 = vpop.f32.mrb[0].mxu0
      %417 = vdwg.mxu0
      %418 = vmatprep.subr.mxu0 0.0
      %v419 = vand.u32 %v194, 4294901760
      %v420 = vsub.f32 %v194, %v419
      %421 = vmatpush1.msra.mxu0 %v420
      %422 = vmatprep.subr.mxu0 0.0
      %v423 = vand.u32 %v195, 4294901760
      %v424 = vsub.f32 %v195, %v423
      %425 = vmatpush1.msra.mxu0 %v424
      %426 = vmatprep.subr.mxu0 0.0
      %v427 = vand.u32 %v196, 4294901760
      %v428 = vsub.f32 %v196, %v427
      %429 = vmatpush1.msra.mxu0 %v428
      %430 = vmatprep.subr.mxu0 0.0
      %v431 = vand.u32 %v197, 4294901760
      %v432 = vsub.f32 %v197, %v431
      %433 = vmatpush1.msra.mxu0 %v432
      %434 = vmatprep.subr.mxu0 0.0
      %v435 = vand.u32 %v198, 4294901760
      %v436 = vsub.f32 %v198, %v435
      %437 = vmatpush1.msra.mxu0 %v436
      %438 = vmatprep.subr.mxu0 0.0
      %v439 = vand.u32 %v199, 4294901760
      %v440 = vsub.f32 %v199, %v439
      %441 = vmatpush1.msra.mxu0 %v440
      %442 = vmatprep.subr.mxu0 0.0
      %v443 = vand.u32 %v200, 4294901760
      %v444 = vsub.f32 %v200, %v443
      %445 = vmatpush1.msra.mxu0 %v444
      %446 = vmatprep.subr.mxu0 0.0
      %v447 = vand.u32 %v201, 4294901760
      %v448 = vsub.f32 %v201, %v447
      %449 = vmatpush1.msra.mxu0 %v448
      %450 = vmatprep.subr.mxu0 0.0
      %451 = vmatpush1.msra.mxu0 0.0
      %452 = vmatprep.subr.mxu0 0.0
      %453 = vmatpush1.msra.mxu0 0.0
      %454 = vmatprep.subr.mxu0 0.0
      %455 = vmatpush1.msra.mxu0 0.0
      %456 = vmatprep.subr.mxu0 0.0
      %457 = vmatpush1.msra.mxu0 0.0
      %458 = vmatprep.subr.mxu0 0.0
      %459 = vmatpush1.msra.mxu0 0.0
      %460 = vmatprep.subr.mxu0 0.0
      %461 = vmatpush1.msra.mxu0 0.0
      %462 = vmatprep.subr.mxu0 0.0
      %463 = vmatpush1.msra.mxu0 0.0
      %464 = vmatprep.subr.mxu0 0.0
      %465 = vmatpush1.msra.mxu0 0.0
      %466 = vmatprep.subr.mxu0 0.0
      %467 = vmatpush1.msra.mxu0 0.0
      %468 = vmatprep.subr.mxu0 0.0
      %469 = vmatpush1.msra.mxu0 0.0
      %470 = vmatprep.subr.mxu0 0.0
      %471 = vmatpush1.msra.mxu0 0.0
      %472 = vmatprep.subr.mxu0 0.0
      %473 = vmatpush1.msra.mxu0 0.0
      %474 = vmatprep.subr.mxu0 0.0
      %475 = vmatpush1.msra.mxu0 0.0
      %476 = vmatprep.subr.mxu0 0.0
      %477 = vmatpush1.msra.mxu0 0.0
      %478 = vmatprep.subr.mxu0 0.0
      %479 = vmatpush1.msra.mxu0 0.0
      %480 = vmatprep.subr.mxu0 0.0
      %481 = vmatpush1.msra.mxu0 0.0
      %482 = vmatprep.subr.mxu0 0.0
      %483 = vmatpush1.msra.mxu0 0.0
      %484 = vmatprep.subr.mxu0 0.0
      %485 = vmatpush1.msra.mxu0 0.0
      %486 = vmatprep.subr.mxu0 0.0
      %487 = vmatpush1.msra.mxu0 0.0
      %488 = vmatprep.subr.mxu0 0.0
      %489 = vmatpush1.msra.mxu0 0.0
      %490 = vmatprep.subr.mxu0 0.0
      %491 = vmatpush1.msra.mxu0 0.0
      %492 = vmatprep.subr.mxu0 0.0
      %493 = vmatpush1.msra.mxu0 0.0
      %494 = vmatprep.subr.mxu0 0.0
      %495 = vmatpush1.msra.mxu0 0.0
      %496 = vmatprep.subr.mxu0 0.0
      %497 = vmatpush1.msra.mxu0 0.0
      %498 = vmatprep.mubr.f32.mxu0 0.0
      %v499 = vand.u32 %v222, 4294901760
      %v500 = vsub.f32 %v222, %v499
      %501 = vmatmul.mubr.f32.gmra.mrb[0].mxu0 %v500
      %v502 = vpop.f32.mrb[0].mxu0
      %v503 = vadd.f32 %v415, %v502
      %v504 = vpop.f32.mrb[0].mxu0
      %505 = vdwg.mxu0
      %506 = vmatprep.subr.mxu0 0.0
      %v507 = vand.u32 %v194, 4294901760
      %508 = vmatpush1.msra.mxu0 %v507
      %509 = vmatprep.subr.mxu0 0.0
      %v510 = vand.u32 %v195, 4294901760
      %511 = vmatpush1.msra.mxu0 %v510
      %512 = vmatprep.subr.mxu0 0.0
      %v513 = vand.u32 %v196, 4294901760
      %514 = vmatpush1.msra.mxu0 %v513
      %515 = vmatprep.subr.mxu0 0.0
      %v516 = vand.u32 %v197, 4294901760
      %517 = vmatpush1.msra.mxu0 %v516
      %518 = vmatprep.subr.mxu0 0.0
      %v519 = vand.u32 %v198, 4294901760
      %520 = vmatpush1.msra.mxu0 %v519
      %521 = vmatprep.subr.mxu0 0.0
      %v522 = vand.u32 %v199, 4294901760
      %523 = vmatpush1.msra.mxu0 %v522
      %524 = vmatprep.subr.mxu0 0.0
      %v525 = vand.u32 %v200, 4294901760
      %526 = vmatpush1.msra.mxu0 %v525
      %527 = vmatprep.subr.mxu0 0.0
      %v528 = vand.u32 %v201, 4294901760
      %529 = vmatpush1.msra.mxu0 %v528
      %530 = vmatprep.subr.mxu0 0.0
      %531 = vmatpush1.msra.mxu0 0.0
      %532 = vmatprep.subr.mxu0 0.0
      %533 = vmatpush1.msra.mxu0 0.0
      %534 = vmatprep.subr.mxu0 0.0
      %535 = vmatpush1.msra.mxu0 0.0
      %536 = vmatprep.subr.mxu0 0.0
      %537 = vmatpush1.msra.mxu0 0.0
      %538 = vmatprep.subr.mxu0 0.0
      %539 = vmatpush1.msra.mxu0 0.0
      %540 = vmatprep.subr.mxu0 0.0
      %541 = vmatpush1.msra.mxu0 0.0
      %542 = vmatprep.subr.mxu0 0.0
      %543 = vmatpush1.msra.mxu0 0.0
      %544 = vmatprep.subr.mxu0 0.0
      %545 = vmatpush1.msra.mxu0 0.0
      %546 = vmatprep.subr.mxu0 0.0
      %547 = vmatpush1.msra.mxu0 0.0
      %548 = vmatprep.subr.mxu0 0.0
      %549 = vmatpush1.msra.mxu0 0.0
      %550 = vmatprep.subr.mxu0 0.0
      %551 = vmatpush1.msra.mxu0 0.0
      %552 = vmatprep.subr.mxu0 0.0
      %553 = vmatpush1.msra.mxu0 0.0
      %554 = vmatprep.subr.mxu0 0.0
      %555 = vmatpush1.msra.mxu0 0.0
      %556 = vmatprep.subr.mxu0 0.0
      %557 = vmatpush1.msra.mxu0 0.0
      %558 = vmatprep.subr.mxu0 0.0
      %559 = vmatpush1.msra.mxu0 0.0
      %560 = vmatprep.subr.mxu0 0.0
      %561 = vmatpush1.msra.mxu0 0.0
      %562 = vmatprep.subr.mxu0 0.0
      %563 = vmatpush1.msra.mxu0 0.0
      %564 = vmatprep.subr.mxu0 0.0
      %565 = vmatpush1.msra.mxu0 0.0
      %566 = vmatprep.subr.mxu0 0.0
      %567 = vmatpush1.msra.mxu0 0.0
      %568 = vmatprep.subr.mxu0 0.0
      %569 = vmatpush1.msra.mxu0 0.0
      %570 = vmatprep.subr.mxu0 0.0
      %571 = vmatpush1.msra.mxu0 0.0
      %572 = vmatprep.subr.mxu0 0.0
      %573 = vmatpush1.msra.mxu0 0.0
      %574 = vmatprep.subr.mxu0 0.0
      %575 = vmatpush1.msra.mxu0 0.0
      %576 = vmatprep.subr.mxu0 0.0
      %577 = vmatpush1.msra.mxu0 0.0
      %578 = vmatprep.mubr.f32.mxu0 0.0
      %v579 = vand.u32 %v222, 4294901760
      %v580 = vsub.f32 %v222, %v579
      %v581 = vand.u32 %v580, 4294901760
      %582 = vmatmul.mubr.f32.gmra.mrb[0].mxu0 %v581
      %v583 = vpop.f32.mrb[0].mxu0
      %v584 = vadd.f32 %v503, %v583
      %v585 = vpop.f32.mrb[0].mxu0
      %586 = vdwg.mxu0
      %587 = vmatprep.subr.mxu0 0.0
      %v588 = vand.u32 %v194, 4294901760
      %v589 = vsub.f32 %v194, %v588
      %v590 = vand.u32 %v589, 4294901760
      %591 = vmatpush1.msra.mxu0 %v590
      %592 = vmatprep.subr.mxu0 0.0
      %v593 = vand.u32 %v195, 4294901760
      %v594 = vsub.f32 %v195, %v593
      %v595 = vand.u32 %v594, 4294901760
      %596 = vmatpush1.msra.mxu0 %v595
      %597 = vmatprep.subr.mxu0 0.0
      %v598 = vand.u32 %v196, 4294901760
      %v599 = vsub.f32 %v196, %v598
      %v600 = vand.u32 %v599, 4294901760
      %601 = vmatpush1.msra.mxu0 %v600
      %602 = vmatprep.subr.mxu0 0.0
      %v603 = vand.u32 %v197, 4294901760
      %v604 = vsub.f32 %v197, %v603
      %v605 = vand.u32 %v604, 4294901760
      %606 = vmatpush1.msra.mxu0 %v605
      %607 = vmatprep.subr.mxu0 0.0
      %v608 = vand.u32 %v198, 4294901760
      %v609 = vsub.f32 %v198, %v608
      %v610 = vand.u32 %v609, 4294901760
      %611 = vmatpush1.msra.mxu0 %v610
      %612 = vmatprep.subr.mxu0 0.0
      %v613 = vand.u32 %v199, 4294901760
      %v614 = vsub.f32 %v199, %v613
      %v615 = vand.u32 %v614, 4294901760
      %616 = vmatpush1.msra.mxu0 %v615
      %617 = vmatprep.subr.mxu0 0.0
      %v618 = vand.u32 %v200, 4294901760
      %v619 = vsub.f32 %v200, %v618
      %v620 = vand.u32 %v619, 4294901760
      %621 = vmatpush1.msra.mxu0 %v620
      %622 = vmatprep.subr.mxu0 0.0
      %v623 = vand.u32 %v201, 4294901760
      %v624 = vsub.f32 %v201, %v623
      %v625 = vand.u32 %v624, 4294901760
      %626 = vmatpush1.msra.mxu0 %v625
      %627 = vmatprep.subr.mxu0 0.0
      %628 = vmatpush1.msra.mxu0 0.0
      %629 = vmatprep.subr.mxu0 0.0
      %630 = vmatpush1.msra.mxu0 0.0
      %631 = vmatprep.subr.mxu0 0.0
      %632 = vmatpush1.msra.mxu0 0.0
      %633 = vmatprep.subr.mxu0 0.0
      %634 = vmatpush1.msra.mxu0 0.0
      %635 = vmatprep.subr.mxu0 0.0
      %636 = vmatpush1.msra.mxu0 0.0
      %637 = vmatprep.subr.mxu0 0.0
      %638 = vmatpush1.msra.mxu0 0.0
      %639 = vmatprep.subr.mxu0 0.0
      %640 = vmatpush1.msra.mxu0 0.0
      %641 = vmatprep.subr.mxu0 0.0
      %642 = vmatpush1.msra.mxu0 0.0
      %643 = vmatprep.subr.mxu0 0.0
      %644 = vmatpush1.msra.mxu0 0.0
      %645 = vmatprep.subr.mxu0 0.0
      %646 = vmatpush1.msra.mxu0 0.0
      %647 = vmatprep.subr.mxu0 0.0
      %648 = vmatpush1.msra.mxu0 0.0
      %649 = vmatprep.subr.mxu0 0.0
      %650 = vmatpush1.msra.mxu0 0.0
      %651 = vmatprep.subr.mxu0 0.0
      %652 = vmatpush1.msra.mxu0 0.0
      %653 = vmatprep.subr.mxu0 0.0
      %654 = vmatpush1.msra.mxu0 0.0
      %655 = vmatprep.subr.mxu0 0.0
      %656 = vmatpush1.msra.mxu0 0.0
      %657 = vmatprep.subr.mxu0 0.0
      %658 = vmatpush1.msra.mxu0 0.0
      %659 = vmatprep.subr.mxu0 0.0
      %660 = vmatpush1.msra.mxu0 0.0
      %661 = vmatprep.subr.mxu0 0.0
      %662 = vmatpush1.msra.mxu0 0.0
      %663 = vmatprep.subr.mxu0 0.0
      %664 = vmatpush1.msra.mxu0 0.0
      %665 = vmatprep.subr.mxu0 0.0
      %666 = vmatpush1.msra.mxu0 0.0
      %667 = vmatprep.subr.mxu0 0.0
      %668 = vmatpush1.msra.mxu0 0.0
      %669 = vmatprep.subr.mxu0 0.0
      %670 = vmatpush1.msra.mxu0 0.0
      %671 = vmatprep.subr.mxu0 0.0
      %672 = vmatpush1.msra.mxu0 0.0
      %673 = vmatprep.subr.mxu0 0.0
      %674 = vmatpush1.msra.mxu0 0.0
      %675 = vmatprep.mubr.f32.mxu0 0.0
      %v676 = vand.u32 %v222, 4294901760
      %677 = vmatmul.mubr.f32.gmra.mrb[0].mxu0 %v676
      %v678 = vpop.f32.mrb[0].mxu0
      %v679 = vadd.f32 %v584, %v678
      %v680 = vpop.f32.mrb[0].mxu0
      %681 = vdwg.mxu0
      %682 = vmatprep.subr.mxu0 0.0
      %v683 = vand.u32 %v194, 4294901760
      %684 = vmatpush1.msra.mxu0 %v683
      %685 = vmatprep.subr.mxu0 0.0
      %v686 = vand.u32 %v195, 4294901760
      %687 = vmatpush1.msra.mxu0 %v686
      %688 = vmatprep.subr.mxu0 0.0
      %v689 = vand.u32 %v196, 4294901760
      %690 = vmatpush1.msra.mxu0 %v689
      %691 = vmatprep.subr.mxu0 0.0
      %v692 = vand.u32 %v197, 4294901760
      %693 = vmatpush1.msra.mxu0 %v692
      %694 = vmatprep.subr.mxu0 0.0
      %v695 = vand.u32 %v198, 4294901760
      %696 = vmatpush1.msra.mxu0 %v695
      %697 = vmatprep.subr.mxu0 0.0
      %v698 = vand.u32 %v199, 4294901760
      %699 = vmatpush1.msra.mxu0 %v698
      %700 = vmatprep.subr.mxu0 0.0
      %v701 = vand.u32 %v200, 4294901760
      %702 = vmatpush1.msra.mxu0 %v701
      %703 = vmatprep.subr.mxu0 0.0
      %v704 = vand.u32 %v201, 4294901760
      %705 = vmatpush1.msra.mxu0 %v704
      %706 = vmatprep.subr.mxu0 0.0
      %707 = vmatpush1.msra.mxu0 0.0
      %708 = vmatprep.subr.mxu0 0.0
      %709 = vmatpush1.msra.mxu0 0.0
      %710 = vmatprep.subr.mxu0 0.0
      %711 = vmatpush1.msra.mxu0 0.0
      %712 = vmatprep.subr.mxu0 0.0
      %713 = vmatpush1.msra.mxu0 0.0
      %714 = vmatprep.subr.mxu0 0.0
      %715 = vmatpush1.msra.mxu0 0.0
      %716 = vmatprep.subr.mxu0 0.0
      %717 = vmatpush1.msra.mxu0 0.0
      %718 = vmatprep.subr.mxu0 0.0
      %719 = vmatpush1.msra.mxu0 0.0
      %720 = vmatprep.subr.mxu0 0.0
      %721 = vmatpush1.msra.mxu0 0.0
      %722 = vmatprep.subr.mxu0 0.0
      %723 = vmatpush1.msra.mxu0 0.0
      %724 = vmatprep.subr.mxu0 0.0
      %725 = vmatpush1.msra.mxu0 0.0
      %726 = vmatprep.subr.mxu0 0.0
      %727 = vmatpush1.msra.mxu0 0.0
      %728 = vmatprep.subr.mxu0 0.0
      %729 = vmatpush1.msra.mxu0 0.0
      %730 = vmatprep.subr.mxu0 0.0
      %731 = vmatpush1.msra.mxu0 0.0
      %732 = vmatprep.subr.mxu0 0.0
      %733 = vmatpush1.msra.mxu0 0.0
      %734 = vmatprep.subr.mxu0 0.0
      %735 = vmatpush1.msra.mxu0 0.0
      %736 = vmatprep.subr.mxu0 0.0
      %737 = vmatpush1.msra.mxu0 0.0
      %738 = vmatprep.subr.mxu0 0.0
      %739 = vmatpush1.msra.mxu0 0.0
      %740 = vmatprep.subr.mxu0 0.0
      %741 = vmatpush1.msra.mxu0 0.0
      %742 = vmatprep.subr.mxu0 0.0
      %743 = vmatpush1.msra.mxu0 0.0
      %744 = vmatprep.subr.mxu0 0.0
      %745 = vmatpush1.msra.mxu0 0.0
      %746 = vmatprep.subr.mxu0 0.0
      %747 = vmatpush1.msra.mxu0 0.0
      %748 = vmatprep.subr.mxu0 0.0
      %749 = vmatpush1.msra.mxu0 0.0
      %750 = vmatprep.subr.mxu0 0.0
      %751 = vmatpush1.msra.mxu0 0.0
      %752 = vmatprep.subr.mxu0 0.0
      %753 = vmatpush1.msra.mxu0 0.0
      %754 = vmatprep.mubr.f32.mxu0 0.0
      %v755 = vand.u32 %v222, 4294901760
      %756 = vmatmul.mubr.f32.gmra.mrb[0].mxu0 %v755
      %v757 = vpop.f32.mrb[0].mxu0
      %v758 = vadd.f32 %v679, %v757
      %v759 = vpop.f32.mrb[0].mxu0
      %760 = vdwg.mxu0
      %762 = vrot.lane.b32.xlu0 %v186, 112
      %v763 = vpop.permute.xlu0 %762
      %765 = vrot.lane.b32.xlu0 %v188, 16
      %v766 = vpop.permute.xlu0 %765
      %768 = vrot.lane.b32.xlu0 %v193, 32
      %v769 = vpop.permute.xlu0 %768
      %v771 = vsel %vm214, %v763, %v191
      %v772 = vsel %vm216, %v771, %v766
      %v773 = vsel %vm218, %v772, %v769
      %v775 = vsel %vm220, %v773, 0
      %777 = vmatprep.subr.mxu0 0.0
      %v778 = vand.u32 %v194, 4294901760
      %779 = vmatpush1.msra.mxu0 %v778
      %780 = vmatprep.subr.mxu0 0.0
      %v781 = vand.u32 %v195, 4294901760
      %782 = vmatpush1.msra.mxu0 %v781
      %783 = vmatprep.subr.mxu0 0.0
      %v784 = vand.u32 %v196, 4294901760
      %785 = vmatpush1.msra.mxu0 %v784
      %786 = vmatprep.subr.mxu0 0.0
      %v787 = vand.u32 %v197, 4294901760
      %788 = vmatpush1.msra.mxu0 %v787
      %789 = vmatprep.subr.mxu0 0.0
      %v790 = vand.u32 %v198, 4294901760
      %791 = vmatpush1.msra.mxu0 %v790
      %792 = vmatprep.subr.mxu0 0.0
      %v793 = vand.u32 %v199, 4294901760
      %794 = vmatpush1.msra.mxu0 %v793
      %795 = vmatprep.subr.mxu0 0.0
      %v796 = vand.u32 %v200, 4294901760
      %797 = vmatpush1.msra.mxu0 %v796
      %798 = vmatprep.subr.mxu0 0.0
      %v799 = vand.u32 %v201, 4294901760
      %800 = vmatpush1.msra.mxu0 %v799
      %801 = vmatprep.subr.mxu0 0.0
      %802 = vmatpush1.msra.mxu0 0.0
      %803 = vmatprep.subr.mxu0 0.0
      %804 = vmatpush1.msra.mxu0 0.0
      %805 = vmatprep.subr.mxu0 0.0
      %806 = vmatpush1.msra.mxu0 0.0
      %807 = vmatprep.subr.mxu0 0.0
      %808 = vmatpush1.msra.mxu0 0.0
      %809 = vmatprep.subr.mxu0 0.0
      %810 = vmatpush1.msra.mxu0 0.0
      %811 = vmatprep.subr.mxu0 0.0
      %812 = vmatpush1.msra.mxu0 0.0
      %813 = vmatprep.subr.mxu0 0.0
      %814 = vmatpush1.msra.mxu0 0.0
      %815 = vmatprep.subr.mxu0 0.0
      %816 = vmatpush1.msra.mxu0 0.0
      %817 = vmatprep.subr.mxu0 0.0
      %818 = vmatpush1.msra.mxu0 0.0
      %819 = vmatprep.subr.mxu0 0.0
      %820 = vmatpush1.msra.mxu0 0.0
      %821 = vmatprep.subr.mxu0 0.0
      %822 = vmatpush1.msra.mxu0 0.0
      %823 = vmatprep.subr.mxu0 0.0
      %824 = vmatpush1.msra.mxu0 0.0
      %825 = vmatprep.subr.mxu0 0.0
      %826 = vmatpush1.msra.mxu0 0.0
      %827 = vmatprep.subr.mxu0 0.0
      %828 = vmatpush1.msra.mxu0 0.0
      %829 = vmatprep.subr.mxu0 0.0
      %830 = vmatpush1.msra.mxu0 0.0
      %831 = vmatprep.subr.mxu0 0.0
      %832 = vmatpush1.msra.mxu0 0.0
      %833 = vmatprep.subr.mxu0 0.0
      %834 = vmatpush1.msra.mxu0 0.0
      %835 = vmatprep.subr.mxu0 0.0
      %836 = vmatpush1.msra.mxu0 0.0
      %837 = vmatprep.subr.mxu0 0.0
      %838 = vmatpush1.msra.mxu0 0.0
      %839 = vmatprep.subr.mxu0 0.0
      %840 = vmatpush1.msra.mxu0 0.0
      %841 = vmatprep.subr.mxu0 0.0
      %842 = vmatpush1.msra.mxu0 0.0
      %843 = vmatprep.subr.mxu0 0.0
      %844 = vmatpush1.msra.mxu0 0.0
      %845 = vmatprep.subr.mxu0 0.0
      %846 = vmatpush1.msra.mxu0 0.0
      %847 = vmatprep.subr.mxu0 0.0
      %848 = vmatpush1.msra.mxu0 0.0
      %849 = vmatprep.mubr.f32.mxu0 0.0
      %v850 = vand.u32 %v775, 4294901760
      %v851 = vsub.f32 %v775, %v850
      %v852 = vand.u32 %v851, 4294901760
      %v853 = vsub.f32 %v851, %v852
      %v854 = vand.u32 %v853, 4294901760
      %855 = vmatmul.mubr.f32.gmra.mrb[0].mxu0 %v854
      %v856 = vpop.f32.mrb[0].mxu0
      %v857 = vadd.f32 0.0, %v856
      %v858 = vpop.f32.mrb[0].mxu0
      %859 = vdwg.mxu0
      %860 = vmatprep.subr.mxu0 0.0
      %v861 = vand.u32 %v194, 4294901760
      %v862 = vsub.f32 %v194, %v861
      %v863 = vand.u32 %v862, 4294901760
      %v864 = vsub.f32 %v862, %v863
      %v865 = vand.u32 %v864, 4294901760
      %866 = vmatpush1.msra.mxu0 %v865
      %867 = vmatprep.subr.mxu0 0.0
      %v868 = vand.u32 %v195, 4294901760
      %v869 = vsub.f32 %v195, %v868
      %v870 = vand.u32 %v869, 4294901760
      %v871 = vsub.f32 %v869, %v870
      %v872 = vand.u32 %v871, 4294901760
      %873 = vmatpush1.msra.mxu0 %v872
      %874 = vmatprep.subr.mxu0 0.0
      %v875 = vand.u32 %v196, 4294901760
      %v876 = vsub.f32 %v196, %v875
      %v877 = vand.u32 %v876, 4294901760
      %v878 = vsub.f32 %v876, %v877
      %v879 = vand.u32 %v878, 4294901760
      %880 = vmatpush1.msra.mxu0 %v879
      %881 = vmatprep.subr.mxu0 0.0
      %v882 = vand.u32 %v197, 4294901760
      %v883 = vsub.f32 %v197, %v882
      %v884 = vand.u32 %v883, 4294901760
      %v885 = vsub.f32 %v883, %v884
      %v886 = vand.u32 %v885, 4294901760
      %887 = vmatpush1.msra.mxu0 %v886
      %888 = vmatprep.subr.mxu0 0.0
      %v889 = vand.u32 %v198, 4294901760
      %v890 = vsub.f32 %v198, %v889
      %v891 = vand.u32 %v890, 4294901760
      %v892 = vsub.f32 %v890, %v891
      %v893 = vand.u32 %v892, 4294901760
      %894 = vmatpush1.msra.mxu0 %v893
      %895 = vmatprep.subr.mxu0 0.0
      %v896 = vand.u32 %v199, 4294901760
      %v897 = vsub.f32 %v199, %v896
      %v898 = vand.u32 %v897, 4294901760
      %v899 = vsub.f32 %v897, %v898
      %v900 = vand.u32 %v899, 4294901760
      %901 = vmatpush1.msra.mxu0 %v900
      %902 = vmatprep.subr.mxu0 0.0
      %v903 = vand.u32 %v200, 4294901760
      %v904 = vsub.f32 %v200, %v903
      %v905 = vand.u32 %v904, 4294901760
      %v906 = vsub.f32 %v904, %v905
      %v907 = vand.u32 %v906, 4294901760
      %908 = vmatpush1.msra.mxu0 %v907
      %909 = vmatprep.subr.mxu0 0.0
      %v910 = vand.u32 %v201, 4294901760
      %v911 = vsub.f32 %v201, %v910
      %v912 = vand.u32 %v911, 4294901760
      %v913 = vsub.f32 %v911, %v912
      %v914 = vand.u32 %v913, 4294901760
      %915 = vmatpush1.msra.mxu0 %v914
      %916 = vmatprep.subr.mxu0 0.0
      %917 = vmatpush1.msra.mxu0 0.0
      %918 = vmatprep.subr.mxu0 0.0
      %919 = vmatpush1.msra.mxu0 0.0
      %920 = vmatprep.subr.mxu0 0.0
      %921 = vmatpush1.msra.mxu0 0.0
      %922 = vmatprep.subr.mxu0 0.0
      %923 = vmatpush1.msra.mxu0 0.0
      %924 = vmatprep.subr.mxu0 0.0
      %925 = vmatpush1.msra.mxu0 0.0
      %926 = vmatprep.subr.mxu0 0.0
      %927 = vmatpush1.msra.mxu0 0.0
      %928 = vmatprep.subr.mxu0 0.0
      %929 = vmatpush1.msra.mxu0 0.0
      %930 = vmatprep.subr.mxu0 0.0
      %931 = vmatpush1.msra.mxu0 0.0
      %932 = vmatprep.subr.mxu0 0.0
      %933 = vmatpush1.msra.mxu0 0.0
      %934 = vmatprep.subr.mxu0 0.0
      %935 = vmatpush1.msra.mxu0 0.0
      %936 = vmatprep.subr.mxu0 0.0
      %937 = vmatpush1.msra.mxu0 0.0
      %938 = vmatprep.subr.mxu0 0.0
      %939 = vmatpush1.msra.mxu0 0.0
      %940 = vmatprep.subr.mxu0 0.0
      %941 = vmatpush1.msra.mxu0 0.0
      %942 = vmatprep.subr.mxu0 0.0
      %943 = vmatpush1.msra.mxu0 0.0
      %944 = vmatprep.subr.mxu0 0.0
      %945 = vmatpush1.msra.mxu0 0.0
      %946 = vmatprep.subr.mxu0 0.0
      %947 = vmatpush1.msra.mxu0 0.0
      %948 = vmatprep.subr.mxu0 0.0
      %949 = vmatpush1.msra.mxu0 0.0
      %950 = vmatprep.subr.mxu0 0.0
      %951 = vmatpush1.msra.mxu0 0.0
      %952 = vmatprep.subr.mxu0 0.0
      %953 = vmatpush1.msra.mxu0 0.0
      %954 = vmatprep.subr.mxu0 0.0
      %955 = vmatpush1.msra.mxu0 0.0
      %956 = vmatprep.subr.mxu0 0.0
      %957 = vmatpush1.msra.mxu0 0.0
      %958 = vmatprep.subr.mxu0 0.0
      %959 = vmatpush1.msra.mxu0 0.0
      %960 = vmatprep.subr.mxu0 0.0
      %961 = vmatpush1.msra.mxu0 0.0
      %962 = vmatprep.subr.mxu0 0.0
      %963 = vmatpush1.msra.mxu0 0.0
      %964 = vmatprep.mubr.f32.mxu0 0.0
      %v965 = vand.u32 %v775, 4294901760
      %966 = vmatmul.mubr.f32.gmra.mrb[0].mxu0 %v965
      %v967 = vpop.f32.mrb[0].mxu0
      %v968 = vadd.f32 %v857, %v967
      %v969 = vpop.f32.mrb[0].mxu0
      %970 = vdwg.mxu0
      %971 = vmatprep.subr.mxu0 0.0
      %v972 = vand.u32 %v194, 4294901760
      %v973 = vsub.f32 %v194, %v972
      %974 = vmatpush1.msra.mxu0 %v973
      %975 = vmatprep.subr.mxu0 0.0
      %v976 = vand.u32 %v195, 4294901760
      %v977 = vsub.f32 %v195, %v976
      %978 = vmatpush1.msra.mxu0 %v977
      %979 = vmatprep.subr.mxu0 0.0
      %v980 = vand.u32 %v196, 4294901760
      %v981 = vsub.f32 %v196, %v980
      %982 = vmatpush1.msra.mxu0 %v981
      %983 = vmatprep.subr.mxu0 0.0
      %v984 = vand.u32 %v197, 4294901760
      %v985 = vsub.f32 %v197, %v984
      %986 = vmatpush1.msra.mxu0 %v985
      %987 = vmatprep.subr.mxu0 0.0
      %v988 = vand.u32 %v198, 4294901760
      %v989 = vsub.f32 %v198, %v988
      %990 = vmatpush1.msra.mxu0 %v989
      %991 = vmatprep.subr.mxu0 0.0
      %v992 = vand.u32 %v199, 4294901760
      %v993 = vsub.f32 %v199, %v992
      %994 = vmatpush1.msra.mxu0 %v993
      %995 = vmatprep.subr.mxu0 0.0
      %v996 = vand.u32 %v200, 4294901760
      %v997 = vsub.f32 %v200, %v996
      %998 = vmatpush1.msra.mxu0 %v997
      %999 = vmatprep.subr.mxu0 0.0
      %v1000 = vand.u32 %v201, 4294901760
      %v1001 = vsub.f32 %v201, %v1000
      %1002 = vmatpush1.msra.mxu0 %v1001
      %1003 = vmatprep.subr.mxu0 0.0
      %1004 = vmatpush1.msra.mxu0 0.0
      %1005 = vmatprep.subr.mxu0 0.0
      %1006 = vmatpush1.msra.mxu0 0.0
      %1007 = vmatprep.subr.mxu0 0.0
      %1008 = vmatpush1.msra.mxu0 0.0
      %1009 = vmatprep.subr.mxu0 0.0
      %1010 = vmatpush1.msra.mxu0 0.0
      %1011 = vmatprep.subr.mxu0 0.0
      %1012 = vmatpush1.msra.mxu0 0.0
      %1013 = vmatprep.subr.mxu0 0.0
      %1014 = vmatpush1.msra.mxu0 0.0
      %1015 = vmatprep.subr.mxu0 0.0
      %1016 = vmatpush1.msra.mxu0 0.0
      %1017 = vmatprep.subr.mxu0 0.0
      %1018 = vmatpush1.msra.mxu0 0.0
      %1019 = vmatprep.subr.mxu0 0.0
      %1020 = vmatpush1.msra.mxu0 0.0
      %1021 = vmatprep.subr.mxu0 0.0
      %1022 = vmatpush1.msra.mxu0 0.0
      %1023 = vmatprep.subr.mxu0 0.0
      %1024 = vmatpush1.msra.mxu0 0.0
      %1025 = vmatprep.subr.mxu0 0.0
      %1026 = vmatpush1.msra.mxu0 0.0
      %1027 = vmatprep.subr.mxu0 0.0
      %1028 = vmatpush1.msra.mxu0 0.0
      %1029 = vmatprep.subr.mxu0 0.0
      %1030 = vmatpush1.msra.mxu0 0.0
      %1031 = vmatprep.subr.mxu0 0.0
      %1032 = vmatpush1.msra.mxu0 0.0
      %1033 = vmatprep.subr.mxu0 0.0
      %1034 = vmatpush1.msra.mxu0 0.0
      %1035 = vmatprep.subr.mxu0 0.0
      %1036 = vmatpush1.msra.mxu0 0.0
      %1037 = vmatprep.subr.mxu0 0.0
      %1038 = vmatpush1.msra.mxu0 0.0
      %1039 = vmatprep.subr.mxu0 0.0
      %1040 = vmatpush1.msra.mxu0 0.0
      %1041 = vmatprep.subr.mxu0 0.0
      %1042 = vmatpush1.msra.mxu0 0.0
      %1043 = vmatprep.subr.mxu0 0.0
      %1044 = vmatpush1.msra.mxu0 0.0
      %1045 = vmatprep.subr.mxu0 0.0
      %1046 = vmatpush1.msra.mxu0 0.0
      %1047 = vmatprep.subr.mxu0 0.0
      %1048 = vmatpush1.msra.mxu0 0.0
      %1049 = vmatprep.subr.mxu0 0.0
      %1050 = vmatpush1.msra.mxu0 0.0
      %1051 = vmatprep.mubr.f32.mxu0 0.0
      %v1052 = vand.u32 %v775, 4294901760
      %v1053 = vsub.f32 %v775, %v1052
      %1054 = vmatmul.mubr.f32.gmra.mrb[0].mxu0 %v1053
      %v1055 = vpop.f32.mrb[0].mxu0
      %v1056 = vadd.f32 %v968, %v1055
      %v1057 = vpop.f32.mrb[0].mxu0
      %1058 = vdwg.mxu0
      %1059 = vmatprep.subr.mxu0 0.0
      %v1060 = vand.u32 %v194, 4294901760
      %1061 = vmatpush1.msra.mxu0 %v1060
      %1062 = vmatprep.subr.mxu0 0.0
      %v1063 = vand.u32 %v195, 4294901760
      %1064 = vmatpush1.msra.mxu0 %v1063
      %1065 = vmatprep.subr.mxu0 0.0
      %v1066 = vand.u32 %v196, 4294901760
      %1067 = vmatpush1.msra.mxu0 %v1066
      %1068 = vmatprep.subr.mxu0 0.0
      %v1069 = vand.u32 %v197, 4294901760
      %1070 = vmatpush1.msra.mxu0 %v1069
      %1071 = vmatprep.subr.mxu0 0.0
      %v1072 = vand.u32 %v198, 4294901760
      %1073 = vmatpush1.msra.mxu0 %v1072
      %1074 = vmatprep.subr.mxu0 0.0
      %v1075 = vand.u32 %v199, 4294901760
      %1076 = vmatpush1.msra.mxu0 %v1075
      %1077 = vmatprep.subr.mxu0 0.0
      %v1078 = vand.u32 %v200, 4294901760
      %1079 = vmatpush1.msra.mxu0 %v1078
      %1080 = vmatprep.subr.mxu0 0.0
      %v1081 = vand.u32 %v201, 4294901760
      %1082 = vmatpush1.msra.mxu0 %v1081
      %1083 = vmatprep.subr.mxu0 0.0
      %1084 = vmatpush1.msra.mxu0 0.0
      %1085 = vmatprep.subr.mxu0 0.0
      %1086 = vmatpush1.msra.mxu0 0.0
      %1087 = vmatprep.subr.mxu0 0.0
      %1088 = vmatpush1.msra.mxu0 0.0
      %1089 = vmatprep.subr.mxu0 0.0
      %1090 = vmatpush1.msra.mxu0 0.0
      %1091 = vmatprep.subr.mxu0 0.0
      %1092 = vmatpush1.msra.mxu0 0.0
      %1093 = vmatprep.subr.mxu0 0.0
      %1094 = vmatpush1.msra.mxu0 0.0
      %1095 = vmatprep.subr.mxu0 0.0
      %1096 = vmatpush1.msra.mxu0 0.0
      %1097 = vmatprep.subr.mxu0 0.0
      %1098 = vmatpush1.msra.mxu0 0.0
      %1099 = vmatprep.subr.mxu0 0.0
      %1100 = vmatpush1.msra.mxu0 0.0
      %1101 = vmatprep.subr.mxu0 0.0
      %1102 = vmatpush1.msra.mxu0 0.0
      %1103 = vmatprep.subr.mxu0 0.0
      %1104 = vmatpush1.msra.mxu0 0.0
      %1105 = vmatprep.subr.mxu0 0.0
      %1106 = vmatpush1.msra.mxu0 0.0
      %1107 = vmatprep.subr.mxu0 0.0
      %1108 = vmatpush1.msra.mxu0 0.0
      %1109 = vmatprep.subr.mxu0 0.0
      %1110 = vmatpush1.msra.mxu0 0.0
      %1111 = vmatprep.subr.mxu0 0.0
      %1112 = vmatpush1.msra.mxu0 0.0
      %1113 = vmatprep.subr.mxu0 0.0
      %1114 = vmatpush1.msra.mxu0 0.0
      %1115 = vmatprep.subr.mxu0 0.0
      %1116 = vmatpush1.msra.mxu0 0.0
      %1117 = vmatprep.subr.mxu0 0.0
      %1118 = vmatpush1.msra.mxu0 0.0
      %1119 = vmatprep.subr.mxu0 0.0
      %1120 = vmatpush1.msra.mxu0 0.0
      %1121 = vmatprep.subr.mxu0 0.0
      %1122 = vmatpush1.msra.mxu0 0.0
      %1123 = vmatprep.subr.mxu0 0.0
      %1124 = vmatpush1.msra.mxu0 0.0
      %1125 = vmatprep.subr.mxu0 0.0
      %1126 = vmatpush1.msra.mxu0 0.0
      %1127 = vmatprep.subr.mxu0 0.0
      %1128 = vmatpush1.msra.mxu0 0.0
      %1129 = vmatprep.subr.mxu0 0.0
      %1130 = vmatpush1.msra.mxu0 0.0
      %1131 = vmatprep.mubr.f32.mxu0 0.0
      %v1132 = vand.u32 %v775, 4294901760
      %v1133 = vsub.f32 %v775, %v1132
      %v1134 = vand.u32 %v1133, 4294901760
      %1135 = vmatmul.mubr.f32.gmra.mrb[0].mxu0 %v1134
      %v1136 = vpop.f32.mrb[0].mxu0
      %v1137 = vadd.f32 %v1056, %v1136
      %v1138 = vpop.f32.mrb[0].mxu0
      %1139 = vdwg.mxu0
      %1140 = vmatprep.subr.mxu0 0.0
      %v1141 = vand.u32 %v194, 4294901760
      %v1142 = vsub.f32 %v194, %v1141
      %v1143 = vand.u32 %v1142, 4294901760
      %1144 = vmatpush1.msra.mxu0 %v1143
      %1145 = vmatprep.subr.mxu0 0.0
      %v1146 = vand.u32 %v195, 4294901760
      %v1147 = vsub.f32 %v195, %v1146
      %v1148 = vand.u32 %v1147, 4294901760
      %1149 = vmatpush1.msra.mxu0 %v1148
      %1150 = vmatprep.subr.mxu0 0.0
      %v1151 = vand.u32 %v196, 4294901760
      %v1152 = vsub.f32 %v196, %v1151
      %v1153 = vand.u32 %v1152, 4294901760
      %1154 = vmatpush1.msra.mxu0 %v1153
      %1155 = vmatprep.subr.mxu0 0.0
      %v1156 = vand.u32 %v197, 4294901760
      %v1157 = vsub.f32 %v197, %v1156
      %v1158 = vand.u32 %v1157, 4294901760
      %1159 = vmatpush1.msra.mxu0 %v1158
      %1160 = vmatprep.subr.mxu0 0.0
      %v1161 = vand.u32 %v198, 4294901760
      %v1162 = vsub.f32 %v198, %v1161
      %v1163 = vand.u32 %v1162, 4294901760
      %1164 = vmatpush1.msra.mxu0 %v1163
      %1165 = vmatprep.subr.mxu0 0.0
      %v1166 = vand.u32 %v199, 4294901760
      %v1167 = vsub.f32 %v199, %v1166
      %v1168 = vand.u32 %v1167, 4294901760
      %1169 = vmatpush1.msra.mxu0 %v1168
      %1170 = vmatprep.subr.mxu0 0.0
      %v1171 = vand.u32 %v200, 4294901760
      %v1172 = vsub.f32 %v200, %v1171
      %v1173 = vand.u32 %v1172, 4294901760
      %1174 = vmatpush1.msra.mxu0 %v1173
      %1175 = vmatprep.subr.mxu0 0.0
      %v1176 = vand.u32 %v201, 4294901760
      %v1177 = vsub.f32 %v201, %v1176
      %v1178 = vand.u32 %v1177, 4294901760
      %1179 = vmatpush1.msra.mxu0 %v1178
      %1180 = vmatprep.subr.mxu0 0.0
      %1181 = vmatpush1.msra.mxu0 0.0
      %1182 = vmatprep.subr.mxu0 0.0
      %1183 = vmatpush1.msra.mxu0 0.0
      %1184 = vmatprep.subr.mxu0 0.0
      %1185 = vmatpush1.msra.mxu0 0.0
      %1186 = vmatprep.subr.mxu0 0.0
      %1187 = vmatpush1.msra.mxu0 0.0
      %1188 = vmatprep.subr.mxu0 0.0
      %1189 = vmatpush1.msra.mxu0 0.0
      %1190 = vmatprep.subr.mxu0 0.0
      %1191 = vmatpush1.msra.mxu0 0.0
      %1192 = vmatprep.subr.mxu0 0.0
      %1193 = vmatpush1.msra.mxu0 0.0
      %1194 = vmatprep.subr.mxu0 0.0
      %1195 = vmatpush1.msra.mxu0 0.0
      %1196 = vmatprep.subr.mxu0 0.0
      %1197 = vmatpush1.msra.mxu0 0.0
      %1198 = vmatprep.subr.mxu0 0.0
      %1199 = vmatpush1.msra.mxu0 0.0
      %1200 = vmatprep.subr.mxu0 0.0
      %1201 = vmatpush1.msra.mxu0 0.0
      %1202 = vmatprep.subr.mxu0 0.0
      %1203 = vmatpush1.msra.mxu0 0.0
      %1204 = vmatprep.subr.mxu0 0.0
      %1205 = vmatpush1.msra.mxu0 0.0
      %1206 = vmatprep.subr.mxu0 0.0
      %1207 = vmatpush1.msra.mxu0 0.0
      %1208 = vmatprep.subr.mxu0 0.0
      %1209 = vmatpush1.msra.mxu0 0.0
      %1210 = vmatprep.subr.mxu0 0.0
      %1211 = vmatpush1.msra.mxu0 0.0
      %1212 = vmatprep.subr.mxu0 0.0
      %1213 = vmatpush1.msra.mxu0 0.0
      %1214 = vmatprep.subr.mxu0 0.0
      %1215 = vmatpush1.msra.mxu0 0.0
      %1216 = vmatprep.subr.mxu0 0.0
      %1217 = vmatpush1.msra.mxu0 0.0
      %1218 = vmatprep.subr.mxu0 0.0
      %1219 = vmatpush1.msra.mxu0 0.0
      %1220 = vmatprep.subr.mxu0 0.0
      %1221 = vmatpush1.msra.mxu0 0.0
      %1222 = vmatprep.subr.mxu0 0.0
      %1223 = vmatpush1.msra.mxu0 0.0
      %1224 = vmatprep.subr.mxu0 0.0
      %1225 = vmatpush1.msra.mxu0 0.0
      %1226 = vmatprep.subr.mxu0 0.0
      %1227 = vmatpush1.msra.mxu0 0.0
      %1228 = vmatprep.mubr.f32.mxu0 0.0
      %v1229 = vand.u32 %v775, 4294901760
      %1230 = vmatmul.mubr.f32.gmra.mrb[0].mxu0 %v1229
      %v1231 = vpop.f32.mrb[0].mxu0
      %v1232 = vadd.f32 %v1137, %v1231
      %v1233 = vpop.f32.mrb[0].mxu0
      %1234 = vdwg.mxu0
      %1235 = vmatprep.subr.mxu0 0.0
      %v1236 = vand.u32 %v194, 4294901760
      %1237 = vmatpush1.msra.mxu0 %v1236
      %1238 = vmatprep.subr.mxu0 0.0
      %v1239 = vand.u32 %v195, 4294901760
      %1240 = vmatpush1.msra.mxu0 %v1239
      %1241 = vmatprep.subr.mxu0 0.0
      %v1242 = vand.u32 %v196, 4294901760
      %1243 = vmatpush1.msra.mxu0 %v1242
      %1244 = vmatprep.subr.mxu0 0.0
      %v1245 = vand.u32 %v197, 4294901760
      %1246 = vmatpush1.msra.mxu0 %v1245
      %1247 = vmatprep.subr.mxu0 0.0
      %v1248 = vand.u32 %v198, 4294901760
      %1249 = vmatpush1.msra.mxu0 %v1248
      %1250 = vmatprep.subr.mxu0 0.0
      %v1251 = vand.u32 %v199, 4294901760
      %1252 = vmatpush1.msra.mxu0 %v1251
      %1253 = vmatprep.subr.mxu0 0.0
      %v1254 = vand.u32 %v200, 4294901760
      %1255 = vmatpush1.msra.mxu0 %v1254
      %1256 = vmatprep.subr.mxu0 0.0
      %v1257 = vand.u32 %v201, 4294901760
      %1258 = vmatpush1.msra.mxu0 %v1257
      %1259 = vmatprep.subr.mxu0 0.0
      %1260 = vmatpush1.msra.mxu0 0.0
      %1261 = vmatprep.subr.mxu0 0.0
      %1262 = vmatpush1.msra.mxu0 0.0
      %1263 = vmatprep.subr.mxu0 0.0
      %1264 = vmatpush1.msra.mxu0 0.0
      %1265 = vmatprep.subr.mxu0 0.0
      %1266 = vmatpush1.msra.mxu0 0.0
      %1267 = vmatprep.subr.mxu0 0.0
      %1268 = vmatpush1.msra.mxu0 0.0
      %1269 = vmatprep.subr.mxu0 0.0
      %1270 = vmatpush1.msra.mxu0 0.0
      %1271 = vmatprep.subr.mxu0 0.0
      %1272 = vmatpush1.msra.mxu0 0.0
      %1273 = vmatprep.subr.mxu0 0.0
      %1274 = vmatpush1.msra.mxu0 0.0
      %1275 = vmatprep.subr.mxu0 0.0
      %1276 = vmatpush1.msra.mxu0 0.0
      %1277 = vmatprep.subr.mxu0 0.0
      %1278 = vmatpush1.msra.mxu0 0.0
      %1279 = vmatprep.subr.mxu0 0.0
      %1280 = vmatpush1.msra.mxu0 0.0
      %1281 = vmatprep.subr.mxu0 0.0
      %1282 = vmatpush1.msra.mxu0 0.0
      %1283 = vmatprep.subr.mxu0 0.0
      %1284 = vmatpush1.msra.mxu0 0.0
      %1285 = vmatprep.subr.mxu0 0.0
      %1286 = vmatpush1.msra.mxu0 0.0
      %1287 = vmatprep.subr.mxu0 0.0
      %1288 = vmatpush1.msra.mxu0 0.0
      %1289 = vmatprep.subr.mxu0 0.0
      %1290 = vmatpush1.msra.mxu0 0.0
      %1291 = vmatprep.subr.mxu0 0.0
      %1292 = vmatpush1.msra.mxu0 0.0
      %1293 = vmatprep.subr.mxu0 0.0
      %1294 = vmatpush1.msra.mxu0 0.0
      %1295 = vmatprep.subr.mxu0 0.0
      %1296 = vmatpush1.msra.mxu0 0.0
      %1297 = vmatprep.subr.mxu0 0.0
      %1298 = vmatpush1.msra.mxu0 0.0
      %1299 = vmatprep.subr.mxu0 0.0
      %1300 = vmatpush1.msra.mxu0 0.0
      %1301 = vmatprep.subr.mxu0 0.0
      %1302 = vmatpush1.msra.mxu0 0.0
      %1303 = vmatprep.subr.mxu0 0.0
      %1304 = vmatpush1.msra.mxu0 0.0
      %1305 = vmatprep.subr.mxu0 0.0
      %1306 = vmatpush1.msra.mxu0 0.0
      %1307 = vmatprep.mubr.f32.mxu0 0.0
      %v1308 = vand.u32 %v775, 4294901760
      %1309 = vmatmul.mubr.f32.gmra.mrb[0].mxu0 %v1308
      %v1310 = vpop.f32.mrb[0].mxu0
      %v1311 = vadd.f32 %v1232, %v1310
      %v1312 = vpop.f32.mrb[0].mxu0
      %1313 = vdwg.mxu0
      %1315 = vrot.lane.b32.xlu0 %v1311, 64
      %v1316 = vpop.permute.xlu0 %1315
      %v1318 = vsel %vm220, %v758, %v1316
      %1319 = vst [vmem:[%s172] sm:$0xff] %v1318
      %p1320 = scmp.lt.s32.totalorder %s17, 1
      %s1321 = scalar_select %p1320, %s17, 1
      %p1322 = scmp.lt.s32.totalorder %s18, 0
      %s1323 = scalar_select %p1322, %s18, 0
      %s1324 = sadd.s32 %s1323, %s1321
      %s1325 = smul.addr %s1324, 8
      %s1326 = scalar_lea.vmem %s2, %s1325
      // Predicated region
      $region29: #{iwt.1} parent=27 // pred_check
        %p1327 = pneg %p94
      $region30: #{iwt.1} parent=27 // pred_check_branch
        %1329 = sbr.rel (%p1327) target = $region32
      $region31: #{iwt.1} parent=27 // pred_region
        _
      $region32: #{iwt.1} parent=27 // pred_fallthru
        _
    $region28: #{iwt.1} parent=5 // pred_fallthru
      _
    %p1330 = scmp.le.s32.totalorder 2, %s8
    // Predicated region
    $region33: #{iwt.1} parent=5 // pred_check
      %p1331 = pneg %p1330
    $region34: #{iwt.1} parent=5 // pred_check_branch
      %1333 = sbr.rel (%p1331) target = $region36
    $region35: #{iwt.1} parent=5 // pred_region
      %s1334 = ssub.s32 %s8, 2
      // Predicated region
      $region37: #{iwt.1} parent=35 // pred_check
        %p1335 = pneg %p100
      $region38: #{iwt.1} parent=35 // pred_check_branch
        %1337 = sbr.rel (%p1335) target = $region40
      $region39: #{iwt.1} parent=35 // pred_region
        %p1338 = scmp.lt.s32.totalorder %s19, 1
        %s1339 = scalar_select %p1338, %s19, 1
        %p1340 = scmp.lt.s32.totalorder %s20, 0
        %s1341 = scalar_select %p1340, %s20, 0
        %s1342 = sadd.s32 %s1341, %s1339
        %s1343 = smul.addr %s1342, 8
        %s1344 = scalar_lea.vmem %s2, %s1343
      $region40: #{iwt.1} parent=35 // pred_fallthru
        _
    $region36: #{iwt.1} parent=5 // pred_fallthru
      _
  $region6: #{iwt.1} parent=0 // loop_footer
    %s12 = sadd.s32 1, %s8
  $region7: #{iwt.1} parent=0 // loop_footer_branch
    %7 = sbr.rel target = $region3
  $region8: #{iwt.1} parent=0 // loop_exit
    _

</llo_original>
